<compile_context>
chip_gen: v6e
topology: v6e:2x2x1
jax: 0.10.0
libtpu: 0.0.40
codegen_flags: <defaults>
</compile_context>

<pallas_src>
import jax
import jax.numpy as jnp
from jax.experimental import pallas as pl
from jax.experimental.pallas import tpu as pltpu

EPS = 1e-5


# ---------------------------------------------------------------------------
# Fused GCN kernel: one grid step per sample.
# ---------------------------------------------------------------------------
def _gcn_kernel(x_ref, a_ref, ab_ref, wg_ref, ws_ref, wb_ref, o_ref):
    x = x_ref[0]                                                  # (n, d) f32

    # conv_adj (bn_adj scale folded into A) + bias + ReLU + residual
    z = jnp.dot(a_ref[...], x, preferred_element_type=jnp.float32)   # (n, d)
    z = jnp.maximum(z + ab_ref[...], 0.0) + x                     # ab: (n, 1)

    # conv_wg on the MXU in bf16 with f32 accumulation, then bn_wg affine + ReLU
    z2 = jnp.dot(z.astype(jnp.bfloat16), wg_ref[...],
                 preferred_element_type=jnp.float32)              # (n, d)
    z2 = z2 * ws_ref[...] + wb_ref[...]                           # (1, d) broadcasts
    o_ref[0] = jnp.maximum(z2, 0.0)


def gcn_forward(x, folded):
    """x: (B, n, d) f32; folded = (A, adj_bias, WgT_bf16, wg_scale, wg_bias)."""
    B, n, d = x.shape
    a, ab, wg_t, ws, wb = folded
    return pl.pallas_call(
        _gcn_kernel,
        out_shape=jax.ShapeDtypeStruct((B, n, d), jnp.float32),
        grid=(B,),
        in_specs=[
            pl.BlockSpec((1, n, d), lambda b: (b, 0, 0)),   # x (per-sample)
            pl.BlockSpec((n, n), lambda b: (0, 0)),         # A  = diag(s_adj) @ W_adj
            pl.BlockSpec((n, 1), lambda b: (0, 0)),         # folded bn_adj bias
            pl.BlockSpec((d, d), lambda b: (0, 0)),         # W_wg^T (bf16)
            pl.BlockSpec((1, d), lambda b: (0, 0)),         # bn_wg scale
            pl.BlockSpec((1, d), lambda b: (0, 0)),         # bn_wg bias
        ],
        out_specs=pl.BlockSpec((1, n, d), lambda b: (b, 0, 0)),
        compiler_params=pltpu.CompilerParams(
            dimension_semantics=("parallel",),       # B shards across v7x's 2 TCs
            vmem_limit_bytes=16 * 1024 * 1024,       # actual footprint << 1 MiB
        ),
    )(x, a, ab, wg_t, ws, wb)


# ---------------------------------------------------------------------------
# Deterministic parameters (eval-mode BN with generated running statistics)
# ---------------------------------------------------------------------------
def init_gcn_params(key, node_num, node_fea):
    ks = jax.random.split(key, 10)
    return {
        # conv_adj: Conv1d(node_num, node_num, k=1, bias=False) -> (n, n)
        "w_adj": jax.random.normal(ks[0], (node_num, node_num), jnp.float32) * 0.3,
        "bn_adj_gamma": jax.random.uniform(ks[1], (node_num,), jnp.float32, minval=0.5, maxval=1.5),
        "bn_adj_beta": jax.random.normal(ks[2], (node_num,), jnp.float32) * 0.1,
        "bn_adj_mean": jax.random.normal(ks[3], (node_num,), jnp.float32) * 0.1,
        "bn_adj_var": jax.random.uniform(ks[4], (node_num,), jnp.float32, minval=0.5, maxval=1.5),
        # conv_wg: Conv1d(node_fea, node_fea, k=1, bias=False) -> (d_out, d_in)
        "w_wg": jax.random.normal(ks[5], (node_fea, node_fea), jnp.float32) * 0.05,
        "bn_wg_gamma": jax.random.uniform(ks[6], (node_fea,), jnp.float32, minval=0.5, maxval=1.5),
        "bn_wg_beta": jax.random.normal(ks[7], (node_fea,), jnp.float32) * 0.1,
        "bn_wg_mean": jax.random.normal(ks[8], (node_fea,), jnp.float32) * 0.1,
        "bn_wg_var": jax.random.uniform(ks[9], (node_fea,), jnp.float32, minval=0.5, maxval=1.5),
    }


def fold_params(p):
    # bn_adj folded into the adjacency matmul: scale -> rows of A, bias -> per-node add
    s_adj = p["bn_adj_gamma"] / jnp.sqrt(p["bn_adj_var"] + EPS)
    a = (s_adj[:, None] * p["w_adj"]).astype(jnp.float32)                 # (n, n)
    ab = (p["bn_adj_beta"] - p["bn_adj_mean"] * s_adj)[:, None]           # (n, 1)
    # bn_wg kept as an f32 epilogue affine after the bf16 matmul
    s_wg = p["bn_wg_gamma"] / jnp.sqrt(p["bn_wg_var"] + EPS)
    ws = s_wg[None, :].astype(jnp.float32)                                # (1, d)
    wb = (p["bn_wg_beta"] - p["bn_wg_mean"] * s_wg)[None, :]              # (1, d)
    # conv_wg applied in row layout: out = z @ W_wg^T  (weight stored transposed, bf16)
    wg_t = p["w_wg"].T.astype(jnp.bfloat16)                               # (d_in, d_out)
    return a, ab, wg_t, ws, wb


# ---------------------------------------------------------------------------
# Pure-JAX f32 reference (same eval-mode BN semantics)
# ---------------------------------------------------------------------------
def gcn_reference(x, p):
    s_adj = p["bn_adj_gamma"] / jnp.sqrt(p["bn_adj_var"] + EPS)
    b_adj = p["bn_adj_beta"] - p["bn_adj_mean"] * s_adj
    z = jnp.einsum("ij,bjd->bid", s_adj[:, None] * p["w_adj"], x) + b_adj[None, :, None]
    z = jnp.maximum(z, 0.0) + x
    s_wg = p["bn_wg_gamma"] / jnp.sqrt(p["bn_wg_var"] + EPS)
    b_wg = p["bn_wg_beta"] - p["bn_wg_mean"] * s_wg
    z2 = jnp.einsum("bnd,fd->bnf", z, p["w_wg"]) * s_wg[None, None, :] + b_wg[None, None, :]
    return jnp.maximum(z2, 0.0)


if __name__ == "__main__":
    key = jax.random.PRNGKey(0)
    pkey, xkey = jax.random.split(key)

    # (batch, node_num, node_fea); CPNet instantiates GCN(1, 256) with batch 4 —
    # we use node_num=8 to exercise the general node-mixing matmul while staying tiny.
    B, N, D = 4, 8, 256

    params = init_gcn_params(pkey, N, D)
    folded = fold_params(params)
    x = jax.random.normal(xkey, (B, N, D), jnp.float32)

    run = jax.jit(gcn_forward)
    y = run(x, folded)
    jax.block_until_ready(y)

    y_ref = gcn_reference(x, params)
    assert y.shape == (B, N, D), (y.shape, (B, N, D))
    assert bool(jnp.all(jnp.isfinite(y)))
    max_err = float(jnp.max(jnp.abs(y - y_ref)))
    assert bool(jnp.allclose(y, y_ref, atol=5e-2, rtol=5e-2)), max_err
    print("KERNEL_OK")
</pallas_src>

<mosaic_0001>
module attributes {stable_mosaic.version = 11 : i64} {
  func.func @_gcn_kernel(%arg0: i32, %arg1: memref<1x8x256xf32, #tpu.memory_space<vmem>>, %arg2: memref<8x8xf32, #tpu.memory_space<vmem>>, %arg3: memref<8x1xf32, #tpu.memory_space<vmem>>, %arg4: memref<256x256xbf16, #tpu.memory_space<vmem>>, %arg5: memref<1x256xf32, #tpu.memory_space<vmem>>, %arg6: memref<1x256xf32, #tpu.memory_space<vmem>>, %arg7: memref<1x8x256xf32, #tpu.memory_space<vmem>>) attributes {dimension_semantics = [#tpu.dimension_semantics<parallel>], iteration_bounds = array<i64: 4>, scalar_prefetch = 0 : i64, scratch_operands = 0 : i64, tpu.core_type = #tpu.core_type<tc>, window_params = [{transform_indices = @transform_0, window_bounds = array<i64: 1, 8, 256>}, {pipeline_mode = #tpu.pipeline_mode<synchronous>, transform_indices = @transform_1, window_bounds = array<i64: 8, 8>}, {pipeline_mode = #tpu.pipeline_mode<synchronous>, transform_indices = @transform_2, window_bounds = array<i64: 8, 1>}, {pipeline_mode = #tpu.pipeline_mode<synchronous>, transform_indices = @transform_3, window_bounds = array<i64: 256, 256>}, {pipeline_mode = #tpu.pipeline_mode<synchronous>, transform_indices = @transform_4, window_bounds = array<i64: 1, 256>}, {pipeline_mode = #tpu.pipeline_mode<synchronous>, transform_indices = @transform_5, window_bounds = array<i64: 1, 256>}, {transform_indices = @transform_6, window_bounds = array<i64: 1, 8, 256>}]} {
    %c0 = arith.constant 0 : index
    %c0_0 = arith.constant 0 : index
    %c0_1 = arith.constant 0 : index
    %0 = vector.load %arg1[%c0, %c0_0, %c0_1] : memref<1x8x256xf32, #tpu.memory_space<vmem>>, vector<1x8x256xf32>
    %1 = vector.shape_cast %0 : vector<1x8x256xf32> to vector<8x256xf32>
    %c0_2 = arith.constant 0 : index
    %c0_3 = arith.constant 0 : index
    %2 = vector.load %arg2[%c0_2, %c0_3] : memref<8x8xf32, #tpu.memory_space<vmem>>, vector<8x8xf32>
    %cst = arith.constant dense<0.000000e+00> : vector<8x256xf32>
    %3 = tpu.matmul %2, %1, %cst {dimension_numbers = #tpu.dot_dimension_numbers<[1], [0], [0], [1], [0, 0, 1, 1], [], []>} : vector<8x8xf32>, vector<8x256xf32>, vector<8x256xf32> -> vector<8x256xf32>
    %c0_4 = arith.constant 0 : index
    %c0_5 = arith.constant 0 : index
    %4 = vector.load %arg3[%c0_4, %c0_5] : memref<8x1xf32, #tpu.memory_space<vmem>>, vector<8x1xf32>
    %5 = vector.broadcast %4 : vector<8x1xf32> to vector<8x256xf32>
    %6 = arith.addf %3, %5 : vector<8x256xf32>
    %cst_6 = arith.constant 0.000000e+00 : f32
    %7 = vector.broadcast %cst_6 : f32 to vector<8x256xf32>
    %8 = arith.maximumf %6, %7 : vector<8x256xf32>
    %9 = arith.addf %8, %1 : vector<8x256xf32>
    %10 = arith.truncf %9 : vector<8x256xf32> to vector<8x256xbf16>
    %c0_7 = arith.constant 0 : index
    %c0_8 = arith.constant 0 : index
    %11 = vector.load %arg4[%c0_7, %c0_8] : memref<256x256xbf16, #tpu.memory_space<vmem>>, vector<256x256xbf16>
    %cst_9 = arith.constant dense<0.000000e+00> : vector<8x256xf32>
    %12 = tpu.matmul %10, %11, %cst_9 {dimension_numbers = #tpu.dot_dimension_numbers<[1], [0], [0], [1], [0, 0, 1, 1], [], []>} : vector<8x256xbf16>, vector<256x256xbf16>, vector<8x256xf32> -> vector<8x256xf32>
    %c0_10 = arith.constant 0 : index
    %c0_11 = arith.constant 0 : index
    %13 = vector.load %arg5[%c0_10, %c0_11] : memref<1x256xf32, #tpu.memory_space<vmem>>, vector<1x256xf32>
    %14 = vector.broadcast %13 : vector<1x256xf32> to vector<8x256xf32>
    %15 = arith.mulf %12, %14 : vector<8x256xf32>
    %c0_12 = arith.constant 0 : index
    %c0_13 = arith.constant 0 : index
    %16 = vector.load %arg6[%c0_12, %c0_13] : memref<1x256xf32, #tpu.memory_space<vmem>>, vector<1x256xf32>
    %17 = vector.broadcast %16 : vector<1x256xf32> to vector<8x256xf32>
    %18 = arith.addf %15, %17 : vector<8x256xf32>
    %cst_14 = arith.constant 0.000000e+00 : f32
    %19 = vector.broadcast %cst_14 : f32 to vector<8x256xf32>
    %20 = arith.maximumf %18, %19 : vector<8x256xf32>
    %c0_15 = arith.constant 0 : index
    %c0_16 = arith.constant 0 : index
    %c0_17 = arith.constant 0 : index
    %21 = vector.load %arg7[%c0_15, %c0_16, %c0_17] : memref<1x8x256xf32, #tpu.memory_space<vmem>>, vector<1x8x256xf32>
    %22 = vector.shape_cast %21 : vector<1x8x256xf32> to vector<8x256xf32>
    %23 = vector.shape_cast %20 : vector<8x256xf32> to vector<1x8x256xf32>
    tpu.vector_store %arg7[%c0_15, %c0_16, %c0_17], %23 {strides = array<i32>} : memref<1x8x256xf32, #tpu.memory_space<vmem>>, vector<1x8x256xf32>,
    return
  }
  func.func @transform_0(%arg0: i32) -> (i32, i32, i32) {
    %c0_i32 = arith.constant 0 : i32
    %c0_i32_0 = arith.constant 0 : i32
    %c0_i32_1 = arith.constant 0 : i32
    return %arg0, %c0_i32, %c0_i32_0 : i32, i32, i32
  }
  func.func @transform_1(%arg0: i32) -> (i32, i32) {
    %c0_i32 = arith.constant 0 : i32
    %c0_i32_0 = arith.constant 0 : i32
    %c0_i32_1 = arith.constant 0 : i32
    return %c0_i32, %c0_i32_0 : i32, i32
  }
  func.func @transform_2(%arg0: i32) -> (i32, i32) {
    %c0_i32 = arith.constant 0 : i32
    %c0_i32_0 = arith.constant 0 : i32
    %c0_i32_1 = arith.constant 0 : i32
    return %c0_i32, %c0_i32_0 : i32, i32
  }
  func.func @transform_3(%arg0: i32) -> (i32, i32) {
    %c0_i32 = arith.constant 0 : i32
    %c0_i32_0 = arith.constant 0 : i32
    %c0_i32_1 = arith.constant 0 : i32
    return %c0_i32, %c0_i32_0 : i32, i32
  }
  func.func @transform_4(%arg0: i32) -> (i32, i32) {
    %c0_i32 = arith.constant 0 : i32
    %c0_i32_0 = arith.constant 0 : i32
    %c0_i32_1 = arith.constant 0 : i32
    return %c0_i32, %c0_i32_0 : i32, i32
  }
  func.func @transform_5(%arg0: i32) -> (i32, i32) {
    %c0_i32 = arith.constant 0 : i32
    %c0_i32_0 = arith.constant 0 : i32
    %c0_i32_1 = arith.constant 0 : i32
    return %c0_i32, %c0_i32_0 : i32, i32
  }
  func.func @transform_6(%arg0: i32) -> (i32, i32, i32) {
    %c0_i32 = arith.constant 0 : i32
    %c0_i32_0 = arith.constant 0 : i32
    %c0_i32_1 = arith.constant 0 : i32
    return %arg0, %c0_i32, %c0_i32_0 : i32, i32, i32
  }
}

</mosaic_0001>

<llo_original>
// kernel: gcn_forward.1
$region0: #{gcn_forward.1}
  #allocation0 [shape = 'u32[]', space=smem, size = 0x4, offset = 0x4, fixed_abs, tag = 'smem constant byte address 0x4 - core index']
  #allocation1 [shape = 'u32[144,128]{1,0:T(1,128)}', space=vmem, size = 0x12000, scoped, tag = 'internal scratch']
  %s0 = inlined_call_operand.hbm [shape: f32[4,8,256], index: 0, kind: input, shape index: {}]
  %s1 = inlined_call_operand.vmem [shape: f32[8,8], index: 1, kind: input, shape index: {}]
  %s2 = inlined_call_operand.vmem [shape: f32[8,1], index: 2, kind: input, shape index: {}]
  %s3 = inlined_call_operand.hbm [shape: bf16[256,256], index: 3, kind: input, shape index: {}]
  %s4 = inlined_call_operand.vmem [shape: f32[1,256], index: 4, kind: input, shape index: {}]
  %s5 = inlined_call_operand.vmem [shape: f32[1,256], index: 5, kind: input, shape index: {}]
  %s6 = inlined_call_operand.hbm [shape: f32[4,8,256], index: 6, kind: output, shape index: {}]
  %s7 = sld [smem:[#allocation0]]
  $region65: #{gcn_forward.1} parent=0
    _
  %s9 = ssub.s32 1, %s7
  %s10 = scalar_select 0, %s9, %s7
  $region1: #{gcn_forward.1} parent=0
    #allocation2 [shape = 'u8[16384]{0}', space=vmem, size = 0x4000, scoped, tag = 'input window, operand 0']
    #allocation3 [shape = 's32[2]{0}', space=sflag, size = 0x8, scoped, tag = 'scoped memory for gcn_forward.1']
    #allocation4 [shape = 's32[2]{0}', space=sflag, size = 0x8, scoped, tag = 'scoped memory for gcn_forward.1']
    #allocation5 [shape = 'u8[131072]{0}', space=vmem, size = 0x20000, scoped, tag = 'input window, operand 3, single buffered']
    #allocation6 [shape = 's32[1]{0}', space=sflag, size = 0x4, scoped, tag = 'scoped memory for gcn_forward.1']
    #allocation7 [shape = 'u8[16384]{0}', space=vmem, size = 0x4000, scoped, tag = 'output window, operand 0']
    %11 = vsyncpa [#allocation3], 0
    %s12 = scalar_lea.sflag [#allocation3], 1
    %13 = vsyncpa %s12, 0
    %14 = vsyncpa [#allocation6], 0
    %15 = vsyncpa [#allocation4], 0
    %s16 = scalar_lea.sflag [#allocation4], 1
    %17 = vsyncpa %s16, 0
    loop: start=0, step=1, limit=6
    $region2: #{gcn_forward.1} parent=1 // loop_pre_header
      _
    $region3: #{gcn_forward.1} parent=1 // loop_header
      %s19 = sphi 0, %s23
      %p20 = scmp.ge.s32.totalorder %s19, 6
      %s29 = sphi 0, %s31
      %s32 = sphi 0, %s29
      %s33 = sphi 0, %s32
      %s49 = sphi 0, %s33
      %s53 = sphi 0, %s53
      %s55 = sphi 0, %s53
      %s56 = sphi 0, %s55
      %s70 = sphi 0, %s56
      %s74 = sphi 0, %s74
      %s76 = sphi 0, %s74
      %s77 = sphi 0, %s76
      %s91 = sphi 0, %s77
      %s95 = sphi 0, %s95
      %s97 = sphi 0, %s95
      %s98 = sphi 0, %s97
      %s112 = sphi 0, %s98
      %s116 = sphi 0, %s116
      %s118 = sphi 0, %s116
      %s119 = sphi 0, %s118
      %s133 = sphi 0, %s119
      %s137 = sphi 0, %s137
      %s139 = sphi 0, %s137
      %s140 = sphi 0, %s139
      %s154 = sphi 0, %s140
      %s160 = sphi 0, %s162
      %s163 = sphi 0, %s160
      %s164 = sphi 0, %s163
      %s180 = sphi 0, %s164
    $region4: #{gcn_forward.1} parent=1 // loop_header_branch
      %22 = sbr.rel (%p20) target = $region8
    $region5: #{gcn_forward.1} parent=1 // loop_body
      %s24 = ssub.s32 %s19, 1
      %s25 = ssub.s32 %s19, 2
      %s26 = sadd.s32 %s19, 1
      %s27 = ssub.s32 %s19, %s26
      %p28 = scmp.eq.s32.totalorder %s27, 0
      %s30 = sadd.s32 %s29, 1
      %s31 = scalar_select %p28, %s29, %s30
      %p34 = pneg %p28
      %p35 = scmp.eq.s32.totalorder %s19, 3
      %p36 = por %p34, %p35
      %p37 = scmp.ne.s32.totalorder %s29, %s32
      %p38 = scmp.eq.s32.totalorder %s19, 0
      %p39 = por %p37, %p38
      %p40 = scmp.ne.s32.totalorder %s29, %s32
      %p41 = scmp.eq.s32.totalorder %s24, 3
      %p42 = por %p40, %p41
      %p43 = scmp.ne.s32.totalorder %s32, %s33
      %p44 = scmp.eq.s32.totalorder %s24, 0
      %p45 = por %p43, %p44
      %p46 = scmp.ne.s32.totalorder %s32, %s33
      %p47 = scmp.eq.s32.totalorder %s25, 3
      %p48 = por %p46, %p47
      %p50 = scmp.ne.s32.totalorder %s33, %s49
      %p51 = scmp.eq.s32.totalorder %s25, 0
      %p52 = por %p50, %p51
      %s54 = sadd.s32 %s53, 1
      %p57 = scmp.eq.s32.totalorder %s19, 3
      %p58 = scmp.ne.s32.totalorder %s53, %s55
      %p59 = scmp.eq.s32.totalorder %s19, 0
      %p60 = por %p58, %p59
      %p61 = scmp.ne.s32.totalorder %s53, %s55
      %p62 = scmp.eq.s32.totalorder %s24, 3
      %p63 = por %p61, %p62
      %p64 = scmp.ne.s32.totalorder %s55, %s56
      %p65 = scmp.eq.s32.totalorder %s24, 0
      %p66 = por %p64, %p65
      %p67 = scmp.ne.s32.totalorder %s55, %s56
      %p68 = scmp.eq.s32.totalorder %s25, 3
      %p69 = por %p67, %p68
      %p71 = scmp.ne.s32.totalorder %s56, %s70
      %p72 = scmp.eq.s32.totalorder %s25, 0
      %p73 = por %p71, %p72
      %s75 = sadd.s32 %s74, 1
      %p78 = scmp.eq.s32.totalorder %s19, 3
      %p79 = scmp.ne.s32.totalorder %s74, %s76
      %p80 = scmp.eq.s32.totalorder %s19, 0
      %p81 = por %p79, %p80
      %p82 = scmp.ne.s32.totalorder %s74, %s76
      %p83 = scmp.eq.s32.totalorder %s24, 3
      %p84 = por %p82, %p83
      %p85 = scmp.ne.s32.totalorder %s76, %s77
      %p86 = scmp.eq.s32.totalorder %s24, 0
      %p87 = por %p85, %p86
      %p88 = scmp.ne.s32.totalorder %s76, %s77
      %p89 = scmp.eq.s32.totalorder %s25, 3
      %p90 = por %p88, %p89
      %p92 = scmp.ne.s32.totalorder %s77, %s91
      %p93 = scmp.eq.s32.totalorder %s25, 0
      %p94 = por %p92, %p93
      %s96 = sadd.s32 %s95, 1
      %p99 = scmp.eq.s32.totalorder %s19, 3
      %p100 = scmp.ne.s32.totalorder %s95, %s97
      %p101 = scmp.eq.s32.totalorder %s19, 0
      %p102 = por %p100, %p101
      %p103 = scmp.ne.s32.totalorder %s95, %s97
      %p104 = scmp.eq.s32.totalorder %s24, 3
      %p105 = por %p103, %p104
      %p106 = scmp.ne.s32.totalorder %s97, %s98
      %p107 = scmp.eq.s32.totalorder %s24, 0
      %p108 = por %p106, %p107
      %p109 = scmp.ne.s32.totalorder %s97, %s98
      %p110 = scmp.eq.s32.totalorder %s25, 3
      %p111 = por %p109, %p110
      %p113 = scmp.ne.s32.totalorder %s98, %s112
      %p114 = scmp.eq.s32.totalorder %s25, 0
      %p115 = por %p113, %p114
      %s117 = sadd.s32 %s116, 1
      %p120 = scmp.eq.s32.totalorder %s19, 3
      %p121 = scmp.ne.s32.totalorder %s116, %s118
      %p122 = scmp.eq.s32.totalorder %s19, 0
      %p123 = por %p121, %p122
      %p124 = scmp.ne.s32.totalorder %s116, %s118
      %p125 = scmp.eq.s32.totalorder %s24, 3
      %p126 = por %p124, %p125
      %p127 = scmp.ne.s32.totalorder %s118, %s119
      %p128 = scmp.eq.s32.totalorder %s24, 0
      %p129 = por %p127, %p128
      %p130 = scmp.ne.s32.totalorder %s118, %s119
      %p131 = scmp.eq.s32.totalorder %s25, 3
      %p132 = por %p130, %p131
      %p134 = scmp.ne.s32.totalorder %s119, %s133
      %p135 = scmp.eq.s32.totalorder %s25, 0
      %p136 = por %p134, %p135
      %s138 = sadd.s32 %s137, 1
      %p141 = scmp.eq.s32.totalorder %s19, 3
      %p142 = scmp.ne.s32.totalorder %s137, %s139
      %p143 = scmp.eq.s32.totalorder %s19, 0
      %p144 = por %p142, %p143
      %p145 = scmp.ne.s32.totalorder %s137, %s139
      %p146 = scmp.eq.s32.totalorder %s24, 3
      %p147 = por %p145, %p146
      %p148 = scmp.ne.s32.totalorder %s139, %s140
      %p149 = scmp.eq.s32.totalorder %s24, 0
      %p150 = por %p148, %p149
      %p151 = scmp.ne.s32.totalorder %s139, %s140
      %p152 = scmp.eq.s32.totalorder %s25, 3
      %p153 = por %p151, %p152
      %p155 = scmp.ne.s32.totalorder %s140, %s154
      %p156 = scmp.eq.s32.totalorder %s25, 0
      %p157 = por %p155, %p156
      %s158 = ssub.s32 %s19, %s26
      %p159 = scmp.eq.s32.totalorder %s158, 0
      %s161 = sadd.s32 %s160, 1
      %s162 = scalar_select %p159, %s160, %s161
      %p165 = pneg %p159
      %p166 = scmp.eq.s32.totalorder %s19, 3
      %p167 = por %p165, %p166
      %p168 = scmp.ne.s32.totalorder %s160, %s163
      %p169 = scmp.eq.s32.totalorder %s19, 0
      %p170 = por %p168, %p169
      %p171 = scmp.ne.s32.totalorder %s160, %s163
      %p172 = scmp.eq.s32.totalorder %s24, 3
      %p173 = por %p171, %p172
      %p174 = scmp.ne.s32.totalorder %s163, %s164
      %p175 = scmp.eq.s32.totalorder %s24, 0
      %p176 = por %p174, %p175
      %p177 = scmp.ne.s32.totalorder %s163, %s164
      %p178 = scmp.eq.s32.totalorder %s25, 3
      %p179 = por %p177, %p178
      %p181 = scmp.ne.s32.totalorder %s164, %s180
      %p182 = scmp.eq.s32.totalorder %s25, 0
      %p183 = por %p181, %p182
      %p184 = scmp.le.s32.totalorder 1, %s19
      %p185 = scmp.lt.s32.totalorder %s19, 5
      %p186 = pnand %p184, %p185
      %p187 = pneg %p186
      // Predicated region
      $region9: #{gcn_forward.1} parent=5 // pred_check
        _
      $region10: #{gcn_forward.1} parent=5 // pred_check_branch
        %189 = sbr.rel (%p186) target = $region12
      $region11: #{gcn_forward.1} parent=5 // pred_region
        %s190 = ssub.s32 %s19, 1
        // Predicated region
        $region13: #{gcn_forward.1} parent=11 // pred_check
          %p191 = pneg %p66
        $region14: #{gcn_forward.1} parent=11 // pred_check_branch
          %193 = sbr.rel (%p191) target = $region16
        $region15: #{gcn_forward.1} parent=11 // pred_region
          _
        $region16: #{gcn_forward.1} parent=11 // pred_fallthru
          _
        // Predicated region
        $region17: #{gcn_forward.1} parent=11 // pred_check
          %p194 = pneg %p87
        $region18: #{gcn_forward.1} parent=11 // pred_check_branch
          %196 = sbr.rel (%p194) target = $region20
        $region19: #{gcn_forward.1} parent=11 // pred_region
          _
        $region20: #{gcn_forward.1} parent=11 // pred_fallthru
          _
        // Predicated region
        $region21: #{gcn_forward.1} parent=11 // pred_check
          %p197 = pneg %p108
        $region22: #{gcn_forward.1} parent=11 // pred_check_branch
          %199 = sbr.rel (%p197) target = $region24
        $region23: #{gcn_forward.1} parent=11 // pred_region
          %s201 = ssub.s32 4096, 4096
          %202 = vsyncadd [#allocation6], %s201
          %s203 = sshll.u32 [#allocation5], 4
          %s204 = int_to_ptr.vmem [resolvable:$true] %s203
          %209 = dma.hbm_to_vmem [thread:$0]  %s3, 4096, %s204, [#allocation6], 128, 128, 8
        $region24: #{gcn_forward.1} parent=11 // pred_fallthru
          _
        // Predicated region
        $region25: #{gcn_forward.1} parent=11 // pred_check
          %p210 = pneg %p129
        $region26: #{gcn_forward.1} parent=11 // pred_check_branch
          %212 = sbr.rel (%p210) target = $region28
        $region27: #{gcn_forward.1} parent=11 // pred_region
          _
        $region28: #{gcn_forward.1} parent=11 // pred_fallthru
          _
        // Predicated region
        $region29: #{gcn_forward.1} parent=11 // pred_check
          %p213 = pneg %p150
        $region30: #{gcn_forward.1} parent=11 // pred_check_branch
          %215 = sbr.rel (%p213) target = $region32
        $region31: #{gcn_forward.1} parent=11 // pred_region
          _
        $region32: #{gcn_forward.1} parent=11 // pred_fallthru
          _
      $region12: #{gcn_forward.1} parent=5 // pred_fallthru
        _
      %p216 = scmp.lt.s32.totalorder %s19, 4
      // Predicated region
      $region33: #{gcn_forward.1} parent=5 // pred_check
        %p217 = pneg %p216
      $region34: #{gcn_forward.1} parent=5 // pred_check_branch
        %219 = sbr.rel (%p217) target = $region36
      $region35: #{gcn_forward.1} parent=5 // pred_region
        // Predicated region
        $region37: #{gcn_forward.1} parent=35 // pred_check
          %p220 = pneg %p39
        $region38: #{gcn_forward.1} parent=35 // pred_check_branch
          %222 = sbr.rel (%p220) target = $region40
        $region39: #{gcn_forward.1} parent=35 // pred_region
          %s223 = sand.u32 %s29, 1
          %s224 = scalar_lea.sflag [#allocation3], %s223
          %s225 = sand.u32 %s29, 1
          %s226 = smul.addr %s225, 16
          %s227 = scalar_lea.vmem [#allocation2], %s226
          %s229 = ssub.s32 256, 256
          %230 = vsyncadd %s224, %s229
          %s231 = smul.addr %s19, 2
          %s232 = smul.addr %s231, 128
          %s233 = scalar_lea.hbm %s0, %s232
          %s235 = sshll.u32 %s227, 4
          %s236 = int_to_ptr.vmem [resolvable:$true] %s235
          %238 = dma.hbm_to_vmem [thread:$0]  %s233, 256, %s236, %s224
        $region40: #{gcn_forward.1} parent=35 // pred_fallthru
          _
      $region36: #{gcn_forward.1} parent=5 // pred_fallthru
        _
      %p239 = scmp.le.s32.totalorder 1, %s19
      %p240 = scmp.lt.s32.totalorder %s19, 5
      %p241 = pnand %p239, %p240
      %p242 = pneg %p241
      // Predicated region
      $region41: #{gcn_forward.1} parent=5 // pred_check
        _
      $region42: #{gcn_forward.1} parent=5 // pred_check_branch
        %244 = sbr.rel (%p241) target = $region44
      $region43: #{gcn_forward.1} parent=5 // pred_region
        %s245 = ssub.s32 %s19, 1
        %s246 = sand.u32 %s32, 1
        %s247 = scalar_lea.sflag [#allocation3], %s246
        %s248 = sand.u32 %s32, 1
        %s249 = smul.addr %s248, 16
        %s250 = scalar_lea.vmem [#allocation2], %s249
        // Predicated region
        $region45: #{gcn_forward.1} parent=43 // pred_check
          %p251 = pneg %p45
        $region46: #{gcn_forward.1} parent=43 // pred_check_branch
          %253 = sbr.rel (%p251) target = $region48
        $region47: #{gcn_forward.1} parent=43 // pred_region
          %254 = dma.done %s247, 256
        $region48: #{gcn_forward.1} parent=43 // pred_fallthru
          _
        // Predicated region
        $region49: #{gcn_forward.1} parent=43 // pred_check
          %p255 = pneg %p108
        $region50: #{gcn_forward.1} parent=43 // pred_check_branch
          %257 = sbr.rel (%p255) target = $region52
        $region51: #{gcn_forward.1} parent=43 // pred_region
          %258 = dma.done [#allocation6], 4096
        $region52: #{gcn_forward.1} parent=43 // pred_fallthru
          _
        %s259 = sand.u32 %s32, 1
        %s260 = scalar_lea.sflag [#allocation3], %s259
        %s261 = sand.u32 %s32, 1
        %s262 = smul.addr %s261, 16
        %s263 = scalar_lea.vmem [#allocation2], %s262
        %p264 = pneg %p45
        %p265 = pneg %p42
        %p266 = pneg %p66
        %p267 = pneg %p63
        %p268 = pneg %p87
        %p269 = pneg %p84
        %p270 = pneg %p108
        %p271 = pneg %p105
        %p272 = pneg %p129
        %p273 = pneg %p126
        %p274 = pneg %p150
        %p275 = pneg %p147
        %p276 = pneg %p176
        %p277 = pneg %p173
        %s278 = sand.u32 %s163, 1
        %s279 = scalar_lea.sflag [#allocation4], %s278
        %s280 = sand.u32 %s163, 1
        %s281 = smul.addr %s280, 16
        %s282 = scalar_lea.vmem [#allocation7], %s281
        %v283 = vld [vmem:[%s250] sm:$0xff]
        %v284 = vld [vmem:[%s250 + $0x8] sm:$0xff]
        %v285 = vld [vmem:[%s1] sm:$0xff]
        %v286 = vld [vmem:[%s2] sm:$0xff]
        %288 = vset.pattern.permute.xlu0 0
        %289 = vperm.xlu0 %288, %v286
        %v290 = vpop.permute.xlu0 %289
        %vm292 = vcmask 64512
        %v294 = vsel %vm292, %v285, 0
        %296 = vmatprep.subr.mxu0 0.0
        %297 = vmatpush1.msra.mxu0 0.0
        %298 = vmatprep.subr.mxu0 0.0
        %299 = vmatpush1.msra.mxu0 0.0
        %300 = vmatprep.subr.mxu0 0.0
        %301 = vmatpush1.msra.mxu0 0.0
        %302 = vmatprep.subr.mxu0 0.0
        %303 = vmatpush1.msra.mxu0 0.0
        %304 = vmatprep.subr.mxu0 0.0
        %305 = vmatpush1.msra.mxu0 0.0
        %306 = vmatprep.subr.mxu0 0.0
        %307 = vmatpush1.msra.mxu0 0.0
        %308 = vmatprep.subr.mxu0 0.0
        %309 = vmatpush1.msra.mxu0 0.0
        %310 = vmatprep.subr.mxu0 0.0
        %311 = vmatpush1.msra.mxu0 0.0
        %312 = vmatprep.subr.mxu0 0.0
        %313 = vmatpush1.msra.mxu0 0.0
        %314 = vmatprep.subr.mxu0 0.0
        %315 = vmatpush1.msra.mxu0 0.0
        %316 = vmatprep.subr.mxu0 0.0
        %317 = vmatpush1.msra.mxu0 0.0
        %318 = vmatprep.subr.mxu0 0.0
        %319 = vmatpush1.msra.mxu0 0.0
        %320 = vmatprep.subr.mxu0 0.0
        %321 = vmatpush1.msra.mxu0 0.0
        %322 = vmatprep.subr.mxu0 0.0
        %323 = vmatpush1.msra.mxu0 0.0
        %324 = vmatprep.subr.mxu0 0.0
        %325 = vmatpush1.msra.mxu0 0.0
        %326 = vmatprep.subr.mxu0 %v284
        %327 = vmatpush1.msra.mxu0 %v283
        %328 = vmatprep.subr.mxu0 0.0
        %329 = vmatpush2.msra.mxu0 0.0
        %330 = vmatprep.subr.mxu0 0.0
        %331 = vmatpush2.msra.mxu0 0.0
        %332 = vmatprep.subr.mxu0 0.0
        %333 = vmatpush2.msra.mxu0 0.0
        %334 = vmatprep.subr.mxu0 0.0
        %335 = vmatpush2.msra.mxu0 0.0
        %336 = vmatprep.subr.mxu0 0.0
        %337 = vmatpush2.msra.mxu0 0.0
        %338 = vmatprep.subr.mxu0 0.0
        %339 = vmatpush2.msra.mxu0 0.0
        %340 = vmatprep.subr.mxu0 0.0
        %341 = vmatpush2.msra.mxu0 0.0
        %342 = vmatprep.subr.mxu0 0.0
        %343 = vmatpush2.msra.mxu0 0.0
        %344 = vmatprep.subr.mxu0 0.0
        %345 = vmatpush2.msra.mxu0 0.0
        %346 = vmatprep.subr.mxu0 0.0
        %347 = vmatpush2.msra.mxu0 0.0
        %348 = vmatprep.subr.mxu0 0.0
        %349 = vmatpush2.msra.mxu0 0.0
        %350 = vmatprep.subr.mxu0 0.0
        %351 = vmatpush2.msra.mxu0 0.0
        %352 = vmatprep.subr.mxu0 0.0
        %353 = vmatpush2.msra.mxu0 0.0
        %354 = vmatprep.subr.mxu0 0.0
        %355 = vmatpush2.msra.mxu0 0.0
        %356 = vmatprep.subr.mxu0 0.0
        %357 = vmatpush2.msra.mxu0 0.0
        %358 = vmatprep.subr.mxu0 0.0
        %359 = vmatpush2.msra.mxu0 0.0
        %360 = vmatprep.mubr.f32.mxu0 0.0
        %361 = vmatmul.mubr.f32.gmra.mxu0 %v294
        %v362 = vpop.f32.mrf.mxu0
        %v363 = vadd.f32 %v290, %v362
        %v364 = vpop.f32.mrf.mxu0
        %v365 = vadd.f32 %v290, %v364
        %366 = vdwg.mxu0
        %v367 = vmax.f32 %v363, 0.0
        %v368 = vmax.f32 %v365, 0.0
        %v369 = vadd.f32 %v367, %v283
        %v370 = vadd.f32 %v368, %v284
        %v371 = vpack.c.bf16 %v369, %v369
        %v372 = vpack.c.bf16 %v370, %v370
        %v373 = vld [vmem:[#allocation5] sm:$0xff]
        %v374 = vld [vmem:[#allocation5 + $0x8] sm:$0xff]
        %v375 = vld [vmem:[#allocation5 + $0x10] sm:$0xff]
        %v376 = vld [vmem:[#allocation5 + $0x18] sm:$0xff]
        %v377 = vld [vmem:[#allocation5 + $0x20] sm:$0xff]
        %v378 = vld [vmem:[#allocation5 + $0x28] sm:$0xff]
        %v379 = vld [vmem:[#allocation5 + $0x30] sm:$0xff]
        %v380 = vld [vmem:[#allocation5 + $0x38] sm:$0xff]
        %v381 = vld [vmem:[#allocation5 + $0x40] sm:$0xff]
        %v382 = vld [vmem:[#allocation5 + $0x48] sm:$0xff]
        %v383 = vld [vmem:[#allocation5 + $0x50] sm:$0xff]
        %v384 = vld [vmem:[#allocation5 + $0x58] sm:$0xff]
        %v385 = vld [vmem:[#allocation5 + $0x60] sm:$0xff]
        %v386 = vld [vmem:[#allocation5 + $0x68] sm:$0xff]
        %v387 = vld [vmem:[#allocation5 + $0x70] sm:$0xff]
        %v388 = vld [vmem:[#allocation5 + $0x78] sm:$0xff]
        %v389 = vld [vmem:[#allocation5 + $0x80] sm:$0xff]
        %v390 = vld [vmem:[#allocation5 + $0x88] sm:$0xff]
        %v391 = vld [vmem:[#allocation5 + $0x90] sm:$0xff]
        %v392 = vld [vmem:[#allocation5 + $0x98] sm:$0xff]
        %v393 = vld [vmem:[#allocation5 + $0xa0] sm:$0xff]
        %v394 = vld [vmem:[#allocation5 + $0xa8] sm:$0xff]
        %v395 = vld [vmem:[#allocation5 + $0xb0] sm:$0xff]
        %v396 = vld [vmem:[#allocation5 + $0xb8] sm:$0xff]
        %v397 = vld [vmem:[#allocation5 + $0xc0] sm:$0xff]
        %v398 = vld [vmem:[#allocation5 + $0xc8] sm:$0xff]
        %v399 = vld [vmem:[#allocation5 + $0xd0] sm:$0xff]
        %v400 = vld [vmem:[#allocation5 + $0xd8] sm:$0xff]
        %v401 = vld [vmem:[#allocation5 + $0xe0] sm:$0xff]
        %v402 = vld [vmem:[#allocation5 + $0xe8] sm:$0xff]
        %v403 = vld [vmem:[#allocation5 + $0xf0] sm:$0xff]
        %v404 = vld [vmem:[#allocation5 + $0xf8] sm:$0xff]
        %v437 = vunpack.c.l.b16 %v373
        %v438 = vunpack.c.h.b16 %v373
        %v439 = vunpack.c.l.b16 %v374
        %v440 = vunpack.c.h.b16 %v374
        %v441 = vunpack.c.l.b16 %v375
        %v442 = vunpack.c.h.b16 %v375
        %v443 = vunpack.c.l.b16 %v376
        %v444 = vunpack.c.h.b16 %v376
        %v445 = vunpack.c.l.b16 %v377
        %v446 = vunpack.c.h.b16 %v377
        %v447 = vunpack.c.l.b16 %v378
        %v448 = vunpack.c.h.b16 %v378
        %v449 = vunpack.c.l.b16 %v379
        %v450 = vunpack.c.h.b16 %v379
        %v451 = vunpack.c.l.b16 %v380
        %v452 = vunpack.c.h.b16 %v380
        %v453 = vunpack.c.l.b16 %v381
        %v454 = vunpack.c.h.b16 %v381
        %v455 = vunpack.c.l.b16 %v382
        %v456 = vunpack.c.h.b16 %v382
        %v457 = vunpack.c.l.b16 %v383
        %v458 = vunpack.c.h.b16 %v383
        %v459 = vunpack.c.l.b16 %v384
        %v460 = vunpack.c.h.b16 %v384
        %v461 = vunpack.c.l.b16 %v385
        %v462 = vunpack.c.h.b16 %v385
        %v463 = vunpack.c.l.b16 %v386
        %v464 = vunpack.c.h.b16 %v386
        %v465 = vunpack.c.l.b16 %v387
        %v466 = vunpack.c.h.b16 %v387
        %v467 = vunpack.c.l.b16 %v388
        %v468 = vunpack.c.h.b16 %v388
        %v469 = vunpack.c.l.b16 %v389
        %v470 = vunpack.c.h.b16 %v389
        %v471 = vunpack.c.l.b16 %v390
        %v472 = vunpack.c.h.b16 %v390
        %v473 = vunpack.c.l.b16 %v391
        %v474 = vunpack.c.h.b16 %v391
        %v475 = vunpack.c.l.b16 %v392
        %v476 = vunpack.c.h.b16 %v392
        %v477 = vunpack.c.l.b16 %v393
        %v478 = vunpack.c.h.b16 %v393
        %v479 = vunpack.c.l.b16 %v394
        %v480 = vunpack.c.h.b16 %v394
        %v481 = vunpack.c.l.b16 %v395
        %v482 = vunpack.c.h.b16 %v395
        %v483 = vunpack.c.l.b16 %v396
        %v484 = vunpack.c.h.b16 %v396
        %v485 = vunpack.c.l.b16 %v397
        %v486 = vunpack.c.h.b16 %v397
        %v487 = vunpack.c.l.b16 %v398
        %v488 = vunpack.c.h.b16 %v398
        %v489 = vunpack.c.l.b16 %v399
        %v490 = vunpack.c.h.b16 %v399
        %v491 = vunpack.c.l.b16 %v400
        %v492 = vunpack.c.h.b16 %v400
        %v493 = vunpack.c.l.b16 %v401
        %v494 = vunpack.c.h.b16 %v401
        %v495 = vunpack.c.l.b16 %v402
        %v496 = vunpack.c.h.b16 %v402
        %v497 = vunpack.c.l.b16 %v403
        %v498 = vunpack.c.h.b16 %v403
        %v499 = vunpack.c.l.b16 %v404
        %v500 = vunpack.c.h.b16 %v404
        %v501 = vpack.c.b16 %v439, %v437
        %v502 = vpack.c.b16 %v440, %v438
        %v503 = vpack.c.b16 %v443, %v441
        %v504 = vpack.c.b16 %v444, %v442
        %v505 = vpack.c.b16 %v447, %v445
        %v506 = vpack.c.b16 %v448, %v446
        %v507 = vpack.c.b16 %v451, %v449
        %v508 = vpack.c.b16 %v452, %v450
        %v509 = vpack.c.b16 %v455, %v453
        %v510 = vpack.c.b16 %v456, %v454
        %v511 = vpack.c.b16 %v459, %v457
        %v512 = vpack.c.b16 %v460, %v458
        %v513 = vpack.c.b16 %v463, %v461
        %v514 = vpack.c.b16 %v464, %v462
        %v515 = vpack.c.b16 %v467, %v465
        %v516 = vpack.c.b16 %v468, %v466
        %v517 = vpack.c.b16 %v471, %v469
        %v518 = vpack.c.b16 %v472, %v470
        %v519 = vpack.c.b16 %v475, %v473
        %v520 = vpack.c.b16 %v476, %v474
        %v521 = vpack.c.b16 %v479, %v477
        %v522 = vpack.c.b16 %v480, %v478
        %v523 = vpack.c.b16 %v483, %v481
        %v524 = vpack.c.b16 %v484, %v482
        %v525 = vpack.c.b16 %v487, %v485
        %v526 = vpack.c.b16 %v488, %v486
        %v527 = vpack.c.b16 %v491, %v489
        %v528 = vpack.c.b16 %v492, %v490
        %v529 = vpack.c.b16 %v495, %v493
        %v530 = vpack.c.b16 %v496, %v494
        %v531 = vpack.c.b16 %v499, %v497
        %v532 = vpack.c.b16 %v500, %v498
        %565 = vmatprep.subr.bf16.mxu0 %v516
        %566 = vmatpush1.bf16.msra.mxu0 %v515
        %567 = vmatprep.subr.bf16.mxu0 %v514
        %568 = vmatpush1.bf16.msra.mxu0 %v513
        %569 = vmatprep.subr.bf16.mxu0 %v512
        %570 = vmatpush1.bf16.msra.mxu0 %v511
        %571 = vmatprep.subr.bf16.mxu0 %v510
        %572 = vmatpush1.bf16.msra.mxu0 %v509
        %573 = vmatprep.subr.bf16.mxu0 %v508
        %574 = vmatpush1.bf16.msra.mxu0 %v507
        %575 = vmatprep.subr.bf16.mxu0 %v506
        %576 = vmatpush1.bf16.msra.mxu0 %v505
        %577 = vmatprep.subr.bf16.mxu0 %v504
        %578 = vmatpush1.bf16.msra.mxu0 %v503
        %579 = vmatprep.subr.bf16.mxu0 %v502
        %580 = vmatpush1.bf16.msra.mxu0 %v501
        %581 = vmatprep.subr.bf16.mxu0 %v532
        %582 = vmatpush2.bf16.msra.mxu0 %v531
        %583 = vmatprep.subr.bf16.mxu0 %v530
        %584 = vmatpush2.bf16.msra.mxu0 %v529
        %585 = vmatprep.subr.bf16.mxu0 %v528
        %586 = vmatpush2.bf16.msra.mxu0 %v527
        %587 = vmatprep.subr.bf16.mxu0 %v526
        %588 = vmatpush2.bf16.msra.mxu0 %v525
        %589 = vmatprep.subr.bf16.mxu0 %v524
        %590 = vmatpush2.bf16.msra.mxu0 %v523
        %591 = vmatprep.subr.bf16.mxu0 %v522
        %592 = vmatpush2.bf16.msra.mxu0 %v521
        %593 = vmatprep.subr.bf16.mxu0 %v520
        %594 = vmatpush2.bf16.msra.mxu0 %v519
        %595 = vmatprep.subr.bf16.mxu0 %v518
        %596 = vmatpush2.bf16.msra.mxu0 %v517
        %597 = vmatprep.mubr.bf16.mxu0 %v372
        %598 = vmatmul.mubr.bf16.gmra.mxu0 %v371
        %v599 = vpop.f32.mrf.mxu0
        %v600 = vadd.f32 0.0, %v599
        %v601 = vpop.f32.mrf.mxu0
        %v602 = vadd.f32 0.0, %v601
        %v603 = vpop.f32.mrf.mxu0
        %v604 = vpop.f32.mrf.mxu0
        %605 = vdwg.mxu0
        %v606 = vld [vmem:[%s4] sm:$0x3]
        %v608 = vlaneseq
        %v609 = vshrl.u32 %v608, 7
        %v610 = vsub.s32 0, %v609
        %v611 = vrot.slane %v606, %v610
        %v612 = vlaneseq
        %v613 = vshrl.u32 %v612, 7
        %v614 = vsub.s32 1, %v613
        %v615 = vrot.slane %v606, %v614
        %v618 = vmul.f32 %v600, %v611
        %v619 = vmul.f32 %v602, %v615
        %v620 = vld [vmem:[%s5] sm:$0x3]
        %v622 = vlaneseq
        %v623 = vshrl.u32 %v622, 7
        %v624 = vsub.s32 0, %v623
        %v625 = vrot.slane %v620, %v624
        %v626 = vlaneseq
        %v627 = vshrl.u32 %v626, 7
        %v628 = vsub.s32 1, %v627
        %v629 = vrot.slane %v620, %v628
        %v632 = vadd.f32 %v618, %v625
        %v633 = vadd.f32 %v619, %v629
        %v634 = vmax.f32 %v632, 0.0
        %v635 = vmax.f32 %v633, 0.0
        %636 = vst [vmem:[%s282] sm:$0xff] %v634
        %637 = vst [vmem:[%s282 + $0x8] sm:$0xff] %v635
        %s638 = sand.u32 %s163, 1
        %s639 = scalar_lea.sflag [#allocation4], %s638
        %s640 = sand.u32 %s163, 1
        %s641 = smul.addr %s640, 16
        %s642 = scalar_lea.vmem [#allocation7], %s641
        // Predicated region
        $region53: #{gcn_forward.1} parent=43 // pred_check
          %p643 = pneg %p173
        $region54: #{gcn_forward.1} parent=43 // pred_check_branch
          %645 = sbr.rel (%p643) target = $region56
        $region55: #{gcn_forward.1} parent=43 // pred_region
          %s647 = ssub.s32 256, 256
          %648 = vsyncadd %s639, %s647
          %s649 = smul.addr %s24, 2
          %s650 = smul.addr %s649, 128
          %s651 = scalar_lea.hbm %s6, %s650
          %s653 = sshll.u32 %s642, 4
          %s654 = int_to_ptr.vmem [resolvable:$true] %s653
          %656 = dma.vmem_to_hbm [thread:$0]  %s654, 256, %s651, %s639
        $region56: #{gcn_forward.1} parent=43 // pred_fallthru
          _
      $region44: #{gcn_forward.1} parent=5 // pred_fallthru
        _
      %p657 = scmp.le.s32.totalorder 2, %s19
      // Predicated region
      $region57: #{gcn_forward.1} parent=5 // pred_check
        %p658 = pneg %p657
      $region58: #{gcn_forward.1} parent=5 // pred_check_branch
        %660 = sbr.rel (%p658) target = $region60
      $region59: #{gcn_forward.1} parent=5 // pred_region
        %s661 = ssub.s32 %s19, 2
        // Predicated region
        $region61: #{gcn_forward.1} parent=59 // pred_check
          %p662 = pneg %p179
        $region62: #{gcn_forward.1} parent=59 // pred_check_branch
          %664 = sbr.rel (%p662) target = $region64
        $region63: #{gcn_forward.1} parent=59 // pred_region
          %s665 = sand.u32 %s164, 1
          %s666 = scalar_lea.sflag [#allocation4], %s665
          %s667 = sand.u32 %s164, 1
          %s668 = smul.addr %s667, 16
          %s669 = scalar_lea.vmem [#allocation7], %s668
          %670 = dma.done %s666, 256
        $region64: #{gcn_forward.1} parent=59 // pred_fallthru
          _
      $region60: #{gcn_forward.1} parent=5 // pred_fallthru
        _
    $region6: #{gcn_forward.1} parent=1 // loop_footer
      %s23 = sadd.s32 1, %s19
    $region7: #{gcn_forward.1} parent=1 // loop_footer_branch
      %18 = sbr.rel target = $region3
    $region8: #{gcn_forward.1} parent=1 // loop_exit
      _
    %671 = vsyncpa [#allocation3], 1
    %s672 = scalar_lea.sflag [#allocation3], 1
    %673 = vsyncpa %s672, 1
    %674 = vsyncpa [#allocation6], 1
    %675 = vsyncpa [#allocation4], 1
    %s676 = scalar_lea.sflag [#allocation4], 1
    %677 = vsyncpa %s676, 1

</llo_original>
